<compile_context>
chip_gen: v5e
topology: v5e:2x2
jax: 0.10.0
libtpu: 0.0.40
codegen_flags: <defaults>
</compile_context>

<pallas_src>
import math
import functools

import jax
import jax.numpy as jnp
from jax.experimental import pallas as pl
from jax.experimental.pallas import tpu as pltpu


def _temporal_attn_kernel(hidden_ref, mask_ref,
                          wqkv_ref, bqkv_ref,
                          wl_ref, bl_ref,
                          out_ref,
                          *, n_heads: int, head_dim: int):
    Bblk, T, D = hidden_ref.shape
    M = Bblk * T

    # Flatten the batch block for the dense projections: (Bblk*T, D).
    # (Leading-dim collapse only; last two dims untouched -> no relayout.)
    x2 = hidden_ref[...].reshape(M, D)              # f32, kept for the residual
    x2_bf = x2.astype(jnp.bfloat16)                 # MXU operand

    # Fused Q/K/V projection.  wqkv is already bf16 [in, 3*out] with the
    # 1/sqrt(head_dim) scale folded into the Q columns; f32 accumulation.
    qkv = jnp.dot(x2_bf, wqkv_ref[...], preferred_element_type=jnp.float32)
    qkv = qkv + bqkv_ref[...]

    # Slice Q/K/V and cast once to bf16 for the attention matmuls.
    q = qkv[:, 0 * D:1 * D].astype(jnp.bfloat16).reshape(Bblk, T, D)
    k = qkv[:, 1 * D:2 * D].astype(jnp.bfloat16).reshape(Bblk, T, D)
    v = qkv[:, 2 * D:3 * D].astype(jnp.bfloat16).reshape(Bblk, T, D)

    # Additive mask, broadcast ONCE to (Bblk, T, T) and reused by every head
    # (hoisted out of the unrolled loop -- JAX does not CSE broadcast_in_dim).
    mask = jnp.broadcast_to(mask_ref[...][:, 0], (Bblk, T, T))

    # Per-head attention, batched over the whole batch block.
    ctx_heads = []
    for h in range(n_heads):                        # static, small
        lo = h * head_dim
        hi = lo + head_dim
        qh = q[:, :, lo:hi]                         # (Bblk, T, dh) bf16
        kh = k[:, :, lo:hi]
        vh = v[:, :, lo:hi]
        s = jnp.einsum("bqd,bkd->bqk", qh, kh,
                       preferred_element_type=jnp.float32)   # (Bblk, T, T) f32
        s = s + mask
        s = s - jnp.max(s, axis=-1, keepdims=True)
        p = jnp.exp(s)
        p = p * pl.reciprocal(jnp.sum(p, axis=-1, keepdims=True), approx=True)
        # attention dropout: identity (inference / eval mode)
        ctx_heads.append(jnp.einsum("bqk,bkd->bqd",
                                    p.astype(jnp.bfloat16), vh,
                                    preferred_element_type=jnp.float32))

    # permute(0,2,1,3) + reshape in the reference == concat heads on feature dim.
    context = jnp.concatenate(ctx_heads, axis=-1).reshape(M, D)

    # Residual + feedforward: relu(lin(out)) + out   (residual math stays f32)
    out = context + x2
    ff = jnp.dot(out.astype(jnp.bfloat16), wl_ref[...],
                 preferred_element_type=jnp.float32) + bl_ref[...]
    y = jnp.maximum(ff, 0.0) + out

    out_ref[...] = y.reshape(Bblk, T, D).astype(out_ref.dtype)


def prepare_params(params, n_heads: int, weight_dtype=jnp.bfloat16):
    """One-time host-side transform: fuse Q/K/V, pre-transpose to [in, out],
    fold the 1/sqrt(head_dim) attention scale into the Q weight/bias, and store
    the weights in bf16 (native MXU rate, half the weight DMA).  Biases stay
    f32 (added post-accumulation)."""
    wq, bq = params["wq"], params["bq"]
    wk, bk = params["wk"], params["bk"]
    wv, bv = params["wv"], params["bv"]
    wl, bl = params["wl"], params["bl"]
    D = wq.shape[0]
    scale = 1.0 / math.sqrt(D // n_heads)
    wqkv = jnp.concatenate([wq.T * scale, wk.T, wv.T], axis=1).astype(weight_dtype)
    bqkv = jnp.concatenate([bq * scale, bk, bv], axis=1).astype(jnp.float32)
    return dict(wqkv=wqkv, bqkv=bqkv,
                wl_t=wl.T.astype(weight_dtype), bl=bl.astype(jnp.float32))


def _vmem_bytes_per_batch_elem(T: int, D: int, n_heads: int) -> int:
    """Conservative per-batch-element VMEM footprint of one grid step,
    accounting for 128-lane padding of every (…, D) f32 buffer (4x inflation
    at D=32) and the double-buffered in/out hidden blocks."""
    pad128 = lambda n: ((n + 127) // 128) * 128
    Dp, D3p, Tp = pad128(D), pad128(3 * D), pad128(T)
    f32, bf16 = 4, 2
    rows = T
    b = 0
    b += 2 * 2 * rows * Dp * f32            # in + out blocks, double-buffered
    b += rows * (Dp + D3p) * f32            # x2, qkv
    b += 3 * rows * Dp * (f32 + bf16)       # q/k/v slices + bf16 copies
    b += 4 * rows * Dp * f32                # context, out, ff, y
    b += rows * Dp * bf16                   # bf16 cast of `out`
    b += 3 * n_heads * rows * Tp * f32      # score/prob/ctx working buffers
    return b


def _pick_batch_block(B: int, T: int, D: int, n_heads: int,
                      vmem_budget_bytes: int = 20 * 1024 * 1024) -> int:
    """Largest divisor of B whose per-step footprint fits the VMEM budget.
    Budget (20 MiB) is sized for the smallest generation (v7x: 64 MiB physical,
    32 MiB scoped).  Also capped at B//2 so the 1-D 'parallel' grid has at
    least two steps and both v7x TensorCores get work."""
    per_elem = max(1, _vmem_bytes_per_batch_elem(T, D, n_heads))
    cap = max(1, vmem_budget_bytes // per_elem)
    if B > 1:
        cap = min(cap, max(1, B // 2))
    bblk = 1
    for d in range(1, min(B, cap) + 1):
        if B % d == 0:
            bblk = d
    return bblk


def temporal_attention_layer(hidden_states, attention_mask, prepared, n_heads: int):
    """hidden_states: (B, T, D) f32; attention_mask: (B,1,T,T) or (1,1,T,T) additive."""
    B, T, D = hidden_states.shape
    assert D % n_heads == 0
    head_dim = D // n_heads
    # Only a broadcastable (single) head axis is supported; a per-head mask
    # (B, H, T, T) would be applied incorrectly.
    assert attention_mask.shape[1] == 1, "per-head attention masks not supported"
    assert attention_mask.shape[0] in (1, B)
    assert attention_mask.shape[2:] == (T, T)

    wqkv, bqkv = prepared["wqkv"], prepared["bqkv"]
    wl_t, bl = prepared["wl_t"], prepared["bl"]

    bblk = _pick_batch_block(B, T, D, n_heads)
    grid = (B // bblk,)

    # Batch-shared mask stays resident in VMEM instead of being re-DMA'd.
    if attention_mask.shape[0] == 1:
        mask_spec = pl.BlockSpec((1, 1, T, T), lambda b: (0, 0, 0, 0))
    else:
        mask_spec = pl.BlockSpec((bblk, 1, T, T), lambda b: (b, 0, 0, 0))

    kernel = functools.partial(_temporal_attn_kernel,
                               n_heads=n_heads, head_dim=head_dim)

    H = n_heads
    flops = (2 * B * T * D * 3 * D              # fused QKV projection
             + 2 * B * T * D * D                # FFN
             + 4 * B * H * T * T * head_dim)    # scores + context
    nbytes = lambda x: x.size * x.dtype.itemsize
    bytes_accessed = (nbytes(hidden_states) + nbytes(attention_mask)
                      + nbytes(wqkv) + nbytes(bqkv) + nbytes(wl_t) + nbytes(bl)
                      + B * T * D * hidden_states.dtype.itemsize)
    cost = pl.CostEstimate(flops=flops,
                           transcendentals=B * H * T * T,
                           bytes_accessed=bytes_accessed)

    return pl.pallas_call(
        kernel,
        out_shape=jax.ShapeDtypeStruct((B, T, D), hidden_states.dtype),
        grid_spec=pltpu.PrefetchScalarGridSpec(
            num_scalar_prefetch=0,
            grid=grid,
            in_specs=[
                pl.BlockSpec((bblk, T, D), lambda b: (b, 0, 0)),   # hidden block
                mask_spec,                                         # additive mask
                pl.BlockSpec((D, 3 * D), lambda b: (0, 0)),        # fused qkv weight [in,3*out] bf16
                pl.BlockSpec((1, 3 * D), lambda b: (0, 0)),        # fused qkv bias f32
                pl.BlockSpec((D, D), lambda b: (0, 0)),            # lin weight [in,out] bf16
                pl.BlockSpec((1, D), lambda b: (0, 0)),            # lin bias f32
            ],
            out_specs=pl.BlockSpec((bblk, T, D), lambda b: (b, 0, 0)),
        ),
        compiler_params=pltpu.CompilerParams(
            dimension_semantics=("parallel",),
            # Raise v5e's 16 MiB scoped default; equals the v6e/v7x default and
            # stays well inside v7x's 64 MiB physical VMEM.
            vmem_limit_bytes=32 * 1024 * 1024,
        ),
        cost_estimate=cost,
    )(hidden_states, attention_mask, wqkv, bqkv, wl_t, bl)


def _reference_forward(hidden_states, attention_mask, params, n_heads):
    """Pure-JAX f32 reference mirroring the PyTorch module (eval mode), using
    the ORIGINAL (unfused, untransposed, f32) parameters."""
    B, T, D = hidden_states.shape
    dh = D // n_heads

    def lin(x, w, b):
        return jnp.einsum("btd,od->bto", x, w) + b[0]

    q = lin(hidden_states, params["wq"], params["bq"])
    k = lin(hidden_states, params["wk"], params["bk"])
    v = lin(hidden_states, params["wv"], params["bv"])

    def split_heads(x):  # (B,T,D) -> (B,H,T,dh)
        return x.reshape(B, T, n_heads, dh).transpose(0, 2, 1, 3)

    qh, kh, vh = split_heads(q), split_heads(k), split_heads(v)
    scores = jnp.einsum("bhtd,bhsd->bhts", qh, kh) / math.sqrt(dh)
    scores = scores + attention_mask
    probs = jax.nn.softmax(scores, axis=-1)
    ctx = jnp.einsum("bhts,bhsd->bhtd", probs, vh)
    ctx = ctx.transpose(0, 2, 1, 3).reshape(B, T, D)
    out = ctx + hidden_states
    ff = jnp.einsum("btd,od->bto", out, params["wl"]) + params["bl"][0]
    return jax.nn.relu(ff) + out


if __name__ == "__main__":
    # Small, module-consistent shapes: batch=2, num_time_steps=8, input_dim=32, heads=4.
    B, T, D, H = 2, 8, 32, 4

    key = jax.random.PRNGKey(0)
    keys = jax.random.split(key, 11)

    hidden_states = jax.random.normal(keys[0], (B, T, D), dtype=jnp.float32)

    # Additive attention mask, shared across the batch (0 allowed, -1e9 masked).
    allow = jnp.tril(jnp.ones((T, T), dtype=jnp.float32))
    attention_mask = jnp.where(allow > 0, 0.0, -1e9)[None, None, :, :]  # (1,1,T,T)
    attention_mask = attention_mask.astype(jnp.float32)

    def init_linear(kw, kb, fan_in, fan_out):
        bound = 1.0 / math.sqrt(fan_in)
        w = jax.random.uniform(kw, (fan_out, fan_in), jnp.float32, -bound, bound)
        b = jax.random.uniform(kb, (1, fan_out), jnp.float32, -bound, bound)
        return w, b

    wq, bq = init_linear(keys[1], keys[2], D, D)
    wk, bk = init_linear(keys[3], keys[4], D, D)
    wv, bv = init_linear(keys[5], keys[6], D, D)
    wl, bl = init_linear(keys[7], keys[8], D, D)

    params = dict(wq=wq, bq=bq, wk=wk, bk=bk, wv=wv, bv=bv, wl=wl, bl=bl)
    prepared = prepare_params(params, n_heads=H)

    out = temporal_attention_layer(hidden_states, attention_mask, prepared, n_heads=H)
    out = jax.block_until_ready(out)

    ref = _reference_forward(hidden_states, attention_mask, params, n_heads=H)
    assert out.shape == (B, T, D)
    # Tolerance reflects bf16 MXU operands (f32 accumulation) + approx (EUP)
    # softmax reciprocal versus the fully-f32 reference.
    assert jnp.allclose(out, ref, atol=5e-2, rtol=5e-2), float(jnp.max(jnp.abs(out - ref)))

    print("KERNEL_OK")
</pallas_src>

<mosaic_0001>
module attributes {stable_mosaic.version = 11 : i64} {
  func.func @_temporal_attn_kernel(%arg0: i32, %arg1: memref<1x8x32xf32, #tpu.memory_space<vmem>>, %arg2: memref<1x1x8x8xf32, #tpu.memory_space<vmem>>, %arg3: memref<32x96xbf16, #tpu.memory_space<vmem>>, %arg4: memref<1x96xf32, #tpu.memory_space<vmem>>, %arg5: memref<32x32xbf16, #tpu.memory_space<vmem>>, %arg6: memref<1x32xf32, #tpu.memory_space<vmem>>, %arg7: memref<1x8x32xf32, #tpu.memory_space<vmem>>) attributes {dimension_semantics = [#tpu.dimension_semantics<parallel>], iteration_bounds = array<i64: 2>, scalar_prefetch = 0 : i64, scratch_operands = 0 : i64, tpu.core_type = #tpu.core_type<tc>, window_params = [{transform_indices = @transform_0, window_bounds = array<i64: 1, 8, 32>}, {pipeline_mode = #tpu.pipeline_mode<synchronous>, transform_indices = @transform_1, window_bounds = array<i64: 1, 1, 8, 8>}, {pipeline_mode = #tpu.pipeline_mode<synchronous>, transform_indices = @transform_2, window_bounds = array<i64: 32, 96>}, {pipeline_mode = #tpu.pipeline_mode<synchronous>, transform_indices = @transform_3, window_bounds = array<i64: 1, 96>}, {pipeline_mode = #tpu.pipeline_mode<synchronous>, transform_indices = @transform_4, window_bounds = array<i64: 32, 32>}, {pipeline_mode = #tpu.pipeline_mode<synchronous>, transform_indices = @transform_5, window_bounds = array<i64: 1, 32>}, {transform_indices = @transform_6, window_bounds = array<i64: 1, 8, 32>}]} {
    %c0 = arith.constant 0 : index
    %c0_0 = arith.constant 0 : index
    %c0_1 = arith.constant 0 : index
    %0 = vector.load %arg1[%c0, %c0_0, %c0_1] : memref<1x8x32xf32, #tpu.memory_space<vmem>>, vector<1x8x32xf32>
    %1 = vector.shape_cast %0 : vector<1x8x32xf32> to vector<8x32xf32>
    %2 = arith.truncf %1 : vector<8x32xf32> to vector<8x32xbf16>
    %c0_2 = arith.constant 0 : index
    %c0_3 = arith.constant 0 : index
    %3 = vector.load %arg3[%c0_2, %c0_3] : memref<32x96xbf16, #tpu.memory_space<vmem>>, vector<32x96xbf16>
    %cst = arith.constant dense<0.000000e+00> : vector<8x96xf32>
    %4 = tpu.matmul %2, %3, %cst {dimension_numbers = #tpu.dot_dimension_numbers<[1], [0], [0], [1], [0, 0, 1, 1], [], []>} : vector<8x32xbf16>, vector<32x96xbf16>, vector<8x96xf32> -> vector<8x96xf32>
    %c0_4 = arith.constant 0 : index
    %c0_5 = arith.constant 0 : index
    %5 = vector.load %arg4[%c0_4, %c0_5] : memref<1x96xf32, #tpu.memory_space<vmem>>, vector<1x96xf32>
    %6 = vector.broadcast %5 : vector<1x96xf32> to vector<8x96xf32>
    %7 = arith.addf %4, %6 : vector<8x96xf32>
    %8 = vector.extract_strided_slice %7 {offsets = [0, 0], sizes = [8, 32], strides = [1, 1]} : vector<8x96xf32> to vector<8x32xf32>
    %9 = arith.truncf %8 : vector<8x32xf32> to vector<8x32xbf16>
    %10 = vector.shape_cast %9 : vector<8x32xbf16> to vector<1x8x32xbf16>
    %11 = vector.extract_strided_slice %7 {offsets = [0, 32], sizes = [8, 32], strides = [1, 1]} : vector<8x96xf32> to vector<8x32xf32>
    %12 = arith.truncf %11 : vector<8x32xf32> to vector<8x32xbf16>
    %13 = vector.shape_cast %12 : vector<8x32xbf16> to vector<1x8x32xbf16>
    %14 = vector.extract_strided_slice %7 {offsets = [0, 64], sizes = [8, 32], strides = [1, 1]} : vector<8x96xf32> to vector<8x32xf32>
    %15 = arith.truncf %14 : vector<8x32xf32> to vector<8x32xbf16>
    %16 = vector.shape_cast %15 : vector<8x32xbf16> to vector<1x8x32xbf16>
    %c0_6 = arith.constant 0 : index
    %c0_7 = arith.constant 0 : index
    %c0_8 = arith.constant 0 : index
    %c0_9 = arith.constant 0 : index
    %17 = vector.load %arg2[%c0_6, %c0_7, %c0_8, %c0_9] : memref<1x1x8x8xf32, #tpu.memory_space<vmem>>, vector<1x1x8x8xf32>
    %18 = vector.shape_cast %17 : vector<1x1x8x8xf32> to vector<1x8x8xf32>
    %19 = vector.extract_strided_slice %10 {offsets = [0, 0, 0], sizes = [1, 8, 8], strides = [1, 1, 1]} : vector<1x8x32xbf16> to vector<1x8x8xbf16>
    %20 = vector.extract_strided_slice %13 {offsets = [0, 0, 0], sizes = [1, 8, 8], strides = [1, 1, 1]} : vector<1x8x32xbf16> to vector<1x8x8xbf16>
    %21 = vector.extract_strided_slice %16 {offsets = [0, 0, 0], sizes = [1, 8, 8], strides = [1, 1, 1]} : vector<1x8x32xbf16> to vector<1x8x8xbf16>
    "tpu.trace_start"() <{level = 10 : i32, message = "bqd,bkd->bqk"}> : () -> ()
    %cst_10 = arith.constant dense<0.000000e+00> : vector<1x8x8xf32>
    %22 = tpu.matmul %19, %20, %cst_10 {dimension_numbers = #tpu.dot_dimension_numbers<[2], [2], [1], [1], [0, 0, 0, 1, 1, 1], [0], [0]>} : vector<1x8x8xbf16>, vector<1x8x8xbf16>, vector<1x8x8xf32> -> vector<1x8x8xf32>
    "tpu.trace_stop"() : () -> ()
    %23 = arith.addf %22, %18 : vector<1x8x8xf32>
    %cst_11 = arith.constant dense<0xFF800000> : vector<1x8xf32>
    %24 = vector.multi_reduction <maximumf>, %23, %cst_11 [2] : vector<1x8x8xf32> to vector<1x8xf32>
    %25 = vector.shape_cast %24 : vector<1x8xf32> to vector<1x8x1xf32>
    %26 = vector.broadcast %25 : vector<1x8x1xf32> to vector<1x8x8xf32>
    %27 = arith.subf %23, %26 : vector<1x8x8xf32>
    %28 = math.exp %27 : vector<1x8x8xf32>
    %cst_12 = arith.constant dense<0.000000e+00> : vector<1x8xf32>
    %29 = vector.multi_reduction <add>, %28, %cst_12 [2] : vector<1x8x8xf32> to vector<1x8xf32>
    %30 = vector.shape_cast %29 : vector<1x8xf32> to vector<1x8x1xf32>
    %31 = tpu.reciprocal %30 {approx = true} : vector<1x8x1xf32> -> vector<1x8x1xf32>
    %32 = vector.broadcast %31 : vector<1x8x1xf32> to vector<1x8x8xf32>
    %33 = arith.mulf %28, %32 : vector<1x8x8xf32>
    %34 = arith.truncf %33 : vector<1x8x8xf32> to vector<1x8x8xbf16>
    "tpu.trace_start"() <{level = 10 : i32, message = "bqk,bkd->bqd"}> : () -> ()
    %cst_13 = arith.constant dense<0.000000e+00> : vector<1x8x8xf32>
    %35 = tpu.matmul %34, %21, %cst_13 {dimension_numbers = #tpu.dot_dimension_numbers<[2], [1], [1], [2], [0, 0, 0, 1, 1, 2], [0], [0]>} : vector<1x8x8xbf16>, vector<1x8x8xbf16>, vector<1x8x8xf32> -> vector<1x8x8xf32>
    "tpu.trace_stop"() : () -> ()
    %36 = vector.extract_strided_slice %10 {offsets = [0, 0, 8], sizes = [1, 8, 8], strides = [1, 1, 1]} : vector<1x8x32xbf16> to vector<1x8x8xbf16>
    %37 = vector.extract_strided_slice %13 {offsets = [0, 0, 8], sizes = [1, 8, 8], strides = [1, 1, 1]} : vector<1x8x32xbf16> to vector<1x8x8xbf16>
    %38 = vector.extract_strided_slice %16 {offsets = [0, 0, 8], sizes = [1, 8, 8], strides = [1, 1, 1]} : vector<1x8x32xbf16> to vector<1x8x8xbf16>
    "tpu.trace_start"() <{level = 10 : i32, message = "bqd,bkd->bqk"}> : () -> ()
    %cst_14 = arith.constant dense<0.000000e+00> : vector<1x8x8xf32>
    %39 = tpu.matmul %36, %37, %cst_14 {dimension_numbers = #tpu.dot_dimension_numbers<[2], [2], [1], [1], [0, 0, 0, 1, 1, 1], [0], [0]>} : vector<1x8x8xbf16>, vector<1x8x8xbf16>, vector<1x8x8xf32> -> vector<1x8x8xf32>
    "tpu.trace_stop"() : () -> ()
    %40 = arith.addf %39, %18 : vector<1x8x8xf32>
    %cst_15 = arith.constant dense<0xFF800000> : vector<1x8xf32>
    %41 = vector.multi_reduction <maximumf>, %40, %cst_15 [2] : vector<1x8x8xf32> to vector<1x8xf32>
    %42 = vector.shape_cast %41 : vector<1x8xf32> to vector<1x8x1xf32>
    %43 = vector.broadcast %42 : vector<1x8x1xf32> to vector<1x8x8xf32>
    %44 = arith.subf %40, %43 : vector<1x8x8xf32>
    %45 = math.exp %44 : vector<1x8x8xf32>
    %cst_16 = arith.constant dense<0.000000e+00> : vector<1x8xf32>
    %46 = vector.multi_reduction <add>, %45, %cst_16 [2] : vector<1x8x8xf32> to vector<1x8xf32>
    %47 = vector.shape_cast %46 : vector<1x8xf32> to vector<1x8x1xf32>
    %48 = tpu.reciprocal %47 {approx = true} : vector<1x8x1xf32> -> vector<1x8x1xf32>
    %49 = vector.broadcast %48 : vector<1x8x1xf32> to vector<1x8x8xf32>
    %50 = arith.mulf %45, %49 : vector<1x8x8xf32>
    %51 = arith.truncf %50 : vector<1x8x8xf32> to vector<1x8x8xbf16>
    "tpu.trace_start"() <{level = 10 : i32, message = "bqk,bkd->bqd"}> : () -> ()
    %cst_17 = arith.constant dense<0.000000e+00> : vector<1x8x8xf32>
    %52 = tpu.matmul %51, %38, %cst_17 {dimension_numbers = #tpu.dot_dimension_numbers<[2], [1], [1], [2], [0, 0, 0, 1, 1, 2], [0], [0]>} : vector<1x8x8xbf16>, vector<1x8x8xbf16>, vector<1x8x8xf32> -> vector<1x8x8xf32>
    "tpu.trace_stop"() : () -> ()
    %53 = vector.extract_strided_slice %10 {offsets = [0, 0, 16], sizes = [1, 8, 8], strides = [1, 1, 1]} : vector<1x8x32xbf16> to vector<1x8x8xbf16>
    %54 = vector.extract_strided_slice %13 {offsets = [0, 0, 16], sizes = [1, 8, 8], strides = [1, 1, 1]} : vector<1x8x32xbf16> to vector<1x8x8xbf16>
    %55 = vector.extract_strided_slice %16 {offsets = [0, 0, 16], sizes = [1, 8, 8], strides = [1, 1, 1]} : vector<1x8x32xbf16> to vector<1x8x8xbf16>
    "tpu.trace_start"() <{level = 10 : i32, message = "bqd,bkd->bqk"}> : () -> ()
    %cst_18 = arith.constant dense<0.000000e+00> : vector<1x8x8xf32>
    %56 = tpu.matmul %53, %54, %cst_18 {dimension_numbers = #tpu.dot_dimension_numbers<[2], [2], [1], [1], [0, 0, 0, 1, 1, 1], [0], [0]>} : vector<1x8x8xbf16>, vector<1x8x8xbf16>, vector<1x8x8xf32> -> vector<1x8x8xf32>
    "tpu.trace_stop"() : () -> ()
    %57 = arith.addf %56, %18 : vector<1x8x8xf32>
    %cst_19 = arith.constant dense<0xFF800000> : vector<1x8xf32>
    %58 = vector.multi_reduction <maximumf>, %57, %cst_19 [2] : vector<1x8x8xf32> to vector<1x8xf32>
    %59 = vector.shape_cast %58 : vector<1x8xf32> to vector<1x8x1xf32>
    %60 = vector.broadcast %59 : vector<1x8x1xf32> to vector<1x8x8xf32>
    %61 = arith.subf %57, %60 : vector<1x8x8xf32>
    %62 = math.exp %61 : vector<1x8x8xf32>
    %cst_20 = arith.constant dense<0.000000e+00> : vector<1x8xf32>
    %63 = vector.multi_reduction <add>, %62, %cst_20 [2] : vector<1x8x8xf32> to vector<1x8xf32>
    %64 = vector.shape_cast %63 : vector<1x8xf32> to vector<1x8x1xf32>
    %65 = tpu.reciprocal %64 {approx = true} : vector<1x8x1xf32> -> vector<1x8x1xf32>
    %66 = vector.broadcast %65 : vector<1x8x1xf32> to vector<1x8x8xf32>
    %67 = arith.mulf %62, %66 : vector<1x8x8xf32>
    %68 = arith.truncf %67 : vector<1x8x8xf32> to vector<1x8x8xbf16>
    "tpu.trace_start"() <{level = 10 : i32, message = "bqk,bkd->bqd"}> : () -> ()
    %cst_21 = arith.constant dense<0.000000e+00> : vector<1x8x8xf32>
    %69 = tpu.matmul %68, %55, %cst_21 {dimension_numbers = #tpu.dot_dimension_numbers<[2], [1], [1], [2], [0, 0, 0, 1, 1, 2], [0], [0]>} : vector<1x8x8xbf16>, vector<1x8x8xbf16>, vector<1x8x8xf32> -> vector<1x8x8xf32>
    "tpu.trace_stop"() : () -> ()
    %70 = vector.extract_strided_slice %10 {offsets = [0, 0, 24], sizes = [1, 8, 8], strides = [1, 1, 1]} : vector<1x8x32xbf16> to vector<1x8x8xbf16>
    %71 = vector.extract_strided_slice %13 {offsets = [0, 0, 24], sizes = [1, 8, 8], strides = [1, 1, 1]} : vector<1x8x32xbf16> to vector<1x8x8xbf16>
    %72 = vector.extract_strided_slice %16 {offsets = [0, 0, 24], sizes = [1, 8, 8], strides = [1, 1, 1]} : vector<1x8x32xbf16> to vector<1x8x8xbf16>
    "tpu.trace_start"() <{level = 10 : i32, message = "bqd,bkd->bqk"}> : () -> ()
    %cst_22 = arith.constant dense<0.000000e+00> : vector<1x8x8xf32>
    %73 = tpu.matmul %70, %71, %cst_22 {dimension_numbers = #tpu.dot_dimension_numbers<[2], [2], [1], [1], [0, 0, 0, 1, 1, 1], [0], [0]>} : vector<1x8x8xbf16>, vector<1x8x8xbf16>, vector<1x8x8xf32> -> vector<1x8x8xf32>
    "tpu.trace_stop"() : () -> ()
    %74 = arith.addf %73, %18 : vector<1x8x8xf32>
    %cst_23 = arith.constant dense<0xFF800000> : vector<1x8xf32>
    %75 = vector.multi_reduction <maximumf>, %74, %cst_23 [2] : vector<1x8x8xf32> to vector<1x8xf32>
    %76 = vector.shape_cast %75 : vector<1x8xf32> to vector<1x8x1xf32>
    %77 = vector.broadcast %76 : vector<1x8x1xf32> to vector<1x8x8xf32>
    %78 = arith.subf %74, %77 : vector<1x8x8xf32>
    %79 = math.exp %78 : vector<1x8x8xf32>
    %cst_24 = arith.constant dense<0.000000e+00> : vector<1x8xf32>
    %80 = vector.multi_reduction <add>, %79, %cst_24 [2] : vector<1x8x8xf32> to vector<1x8xf32>
    %81 = vector.shape_cast %80 : vector<1x8xf32> to vector<1x8x1xf32>
    %82 = tpu.reciprocal %81 {approx = true} : vector<1x8x1xf32> -> vector<1x8x1xf32>
    %83 = vector.broadcast %82 : vector<1x8x1xf32> to vector<1x8x8xf32>
    %84 = arith.mulf %79, %83 : vector<1x8x8xf32>
    %85 = arith.truncf %84 : vector<1x8x8xf32> to vector<1x8x8xbf16>
    "tpu.trace_start"() <{level = 10 : i32, message = "bqk,bkd->bqd"}> : () -> ()
    %cst_25 = arith.constant dense<0.000000e+00> : vector<1x8x8xf32>
    %86 = tpu.matmul %85, %72, %cst_25 {dimension_numbers = #tpu.dot_dimension_numbers<[2], [1], [1], [2], [0, 0, 0, 1, 1, 2], [0], [0]>} : vector<1x8x8xbf16>, vector<1x8x8xbf16>, vector<1x8x8xf32> -> vector<1x8x8xf32>
    "tpu.trace_stop"() : () -> ()
    %87 = tpu.concatenate %35, %52, %69, %86 in 2 : vector<1x8x8xf32>, vector<1x8x8xf32>, vector<1x8x8xf32>, vector<1x8x8xf32> -> vector<1x8x32xf32>
    %88 = vector.shape_cast %87 : vector<1x8x32xf32> to vector<8x32xf32>
    %89 = arith.addf %88, %1 : vector<8x32xf32>
    %90 = arith.truncf %89 : vector<8x32xf32> to vector<8x32xbf16>
    %c0_26 = arith.constant 0 : index
    %c0_27 = arith.constant 0 : index
    %91 = vector.load %arg5[%c0_26, %c0_27] : memref<32x32xbf16, #tpu.memory_space<vmem>>, vector<32x32xbf16>
    %cst_28 = arith.constant dense<0.000000e+00> : vector<8x32xf32>
    %92 = tpu.matmul %90, %91, %cst_28 {dimension_numbers = #tpu.dot_dimension_numbers<[1], [0], [0], [1], [0, 0, 1, 1], [], []>} : vector<8x32xbf16>, vector<32x32xbf16>, vector<8x32xf32> -> vector<8x32xf32>
    %c0_29 = arith.constant 0 : index
    %c0_30 = arith.constant 0 : index
    %93 = vector.load %arg6[%c0_29, %c0_30] : memref<1x32xf32, #tpu.memory_space<vmem>>, vector<1x32xf32>
    %94 = vector.broadcast %93 : vector<1x32xf32> to vector<8x32xf32>
    %95 = arith.addf %92, %94 : vector<8x32xf32>
    %cst_31 = arith.constant 0.000000e+00 : f32
    %96 = vector.broadcast %cst_31 : f32 to vector<8x32xf32>
    %97 = arith.maximumf %95, %96 : vector<8x32xf32>
    %98 = arith.addf %97, %89 : vector<8x32xf32>
    %99 = vector.shape_cast %98 : vector<8x32xf32> to vector<1x8x32xf32>
    %c0_32 = arith.constant 0 : index
    %c0_33 = arith.constant 0 : index
    %c0_34 = arith.constant 0 : index
    %100 = vector.load %arg7[%c0_32, %c0_33, %c0_34] : memref<1x8x32xf32, #tpu.memory_space<vmem>>, vector<1x8x32xf32>
    tpu.vector_store %arg7[%c0_32, %c0_33, %c0_34], %99 {strides = array<i32>} : memref<1x8x32xf32, #tpu.memory_space<vmem>>, vector<1x8x32xf32>,
    return
  }
  func.func @transform_0(%arg0: i32) -> (i32, i32, i32) {
    %c0_i32 = arith.constant 0 : i32
    %c0_i32_0 = arith.constant 0 : i32
    %c0_i32_1 = arith.constant 0 : i32
    return %arg0, %c0_i32, %c0_i32_0 : i32, i32, i32
  }
  func.func @transform_1(%arg0: i32) -> (i32, i32, i32, i32) {
    %c0_i32 = arith.constant 0 : i32
    %c0_i32_0 = arith.constant 0 : i32
    %c0_i32_1 = arith.constant 0 : i32
    %c0_i32_2 = arith.constant 0 : i32
    %c0_i32_3 = arith.constant 0 : i32
    return %c0_i32, %c0_i32_0, %c0_i32_1, %c0_i32_2 : i32, i32, i32, i32
  }
  func.func @transform_2(%arg0: i32) -> (i32, i32) {
    %c0_i32 = arith.constant 0 : i32
    %c0_i32_0 = arith.constant 0 : i32
    %c0_i32_1 = arith.constant 0 : i32
    return %c0_i32, %c0_i32_0 : i32, i32
  }
  func.func @transform_3(%arg0: i32) -> (i32, i32) {
    %c0_i32 = arith.constant 0 : i32
    %c0_i32_0 = arith.constant 0 : i32
    %c0_i32_1 = arith.constant 0 : i32
    return %c0_i32, %c0_i32_0 : i32, i32
  }
  func.func @transform_4(%arg0: i32) -> (i32, i32) {
    %c0_i32 = arith.constant 0 : i32
    %c0_i32_0 = arith.constant 0 : i32
    %c0_i32_1 = arith.constant 0 : i32
    return %c0_i32, %c0_i32_0 : i32, i32
  }
  func.func @transform_5(%arg0: i32) -> (i32, i32) {
    %c0_i32 = arith.constant 0 : i32
    %c0_i32_0 = arith.constant 0 : i32
    %c0_i32_1 = arith.constant 0 : i32
    return %c0_i32, %c0_i32_0 : i32, i32
  }
  func.func @transform_6(%arg0: i32) -> (i32, i32, i32) {
    %c0_i32 = arith.constant 0 : i32
    %c0_i32_0 = arith.constant 0 : i32
    %c0_i32_1 = arith.constant 0 : i32
    return %arg0, %c0_i32, %c0_i32_0 : i32, i32, i32
  }
}

</mosaic_0001>

<llo_original>
// kernel: tpu_custom_call.1
$region0: #{tpu_custom_call.1}
  #allocation0 [shape = 'u32[]', space=smem, size = 0x4, offset = 0x4, fixed_abs, tag = 'smem constant byte address 0x4 - core index']
  #allocation1 [shape = 'u32[72,128]{1,0:T(1,128)}', space=vmem, size = 0x9000, scoped, tag = 'internal scratch']
  %s0 = inlined_call_operand.hbm [shape: f32[2,8,32], index: 0, kind: input, shape index: {}]
  %s1 = inlined_call_operand.hbm [shape: f32[1,1,8,8], index: 1, kind: input, shape index: {}]
  %s2 = inlined_call_operand.hbm [shape: bf16[32,96], index: 2, kind: input, shape index: {}]
  %s3 = inlined_call_operand.vmem [shape: f32[1,96], index: 3, kind: input, shape index: {}]
  %s4 = inlined_call_operand.hbm [shape: bf16[32,32], index: 4, kind: input, shape index: {}]
  %s5 = inlined_call_operand.vmem [shape: f32[1,32], index: 5, kind: input, shape index: {}]
  %s6 = inlined_call_operand.hbm [shape: f32[2,8,32], index: 6, kind: output, shape index: {}]
  %s7 = sld [smem:[#allocation0]]
  $region73: #{tpu_custom_call.1} parent=0
    _
  %s9 = ssub.s32 1, %s7
  %s10 = scalar_select 0, %s9, %s7
  $region1: #{tpu_custom_call.1} parent=0
    #allocation2 [shape = 'u8[8192]{0}', space=vmem, size = 0x2000, scoped, tag = 'input window, operand 0']
    #allocation3 [shape = 's32[2]{0}', space=sflag, size = 0x8, scoped, tag = 'scoped memory for tpu_custom_call.1']
    #allocation4 [shape = 's32[2]{0}', space=sflag, size = 0x8, scoped, tag = 'scoped memory for tpu_custom_call.1']
    #allocation5 [shape = 'u8[4096]{0}', space=vmem, size = 0x1000, scoped, tag = 'input window, operand 1, single buffered']
    #allocation6 [shape = 's32[1]{0}', space=sflag, size = 0x4, scoped, tag = 'scoped memory for tpu_custom_call.1']
    #allocation7 [shape = 'u8[8192]{0}', space=vmem, size = 0x2000, scoped, tag = 'input window, operand 2, single buffered']
    #allocation8 [shape = 'u8[8192]{0}', space=vmem, size = 0x2000, scoped, tag = 'input window, operand 4, single buffered']
    #allocation9 [shape = 's32[1]{0}', space=sflag, size = 0x4, scoped, tag = 'scoped memory for tpu_custom_call.1']
    #allocation10 [shape = 'u8[8192]{0}', space=vmem, size = 0x2000, scoped, tag = 'output window, operand 0']
    %11 = vsyncpa [#allocation3], 0
    %s12 = scalar_lea.sflag [#allocation3], 1
    %13 = vsyncpa %s12, 0
    %14 = vsyncpa [#allocation6], 0
    %15 = vsyncpa [#allocation9], 0
    %16 = vsyncpa [#allocation4], 0
    %s17 = scalar_lea.sflag [#allocation4], 1
    %18 = vsyncpa %s17, 0
    loop: start=0, step=1, limit=4
    $region2: #{tpu_custom_call.1} parent=1 // loop_pre_header
      _
    $region3: #{tpu_custom_call.1} parent=1 // loop_header
      %s20 = sphi 0, %s24
      %p21 = scmp.ge.s32.totalorder %s20, 4
      %s30 = sphi 0, %s32
      %s33 = sphi 0, %s30
      %s34 = sphi 0, %s33
      %s50 = sphi 0, %s34
      %s54 = sphi 0, %s54
      %s56 = sphi 0, %s54
      %s57 = sphi 0, %s56
      %s71 = sphi 0, %s57
      %s75 = sphi 0, %s75
      %s77 = sphi 0, %s75
      %s78 = sphi 0, %s77
      %s92 = sphi 0, %s78
      %s96 = sphi 0, %s96
      %s98 = sphi 0, %s96
      %s99 = sphi 0, %s98
      %s113 = sphi 0, %s99
      %s117 = sphi 0, %s117
      %s119 = sphi 0, %s117
      %s120 = sphi 0, %s119
      %s134 = sphi 0, %s120
      %s138 = sphi 0, %s138
      %s140 = sphi 0, %s138
      %s141 = sphi 0, %s140
      %s155 = sphi 0, %s141
      %s161 = sphi 0, %s163
      %s164 = sphi 0, %s161
      %s165 = sphi 0, %s164
      %s181 = sphi 0, %s165
    $region4: #{tpu_custom_call.1} parent=1 // loop_header_branch
      %23 = sbr.rel (%p21) target = $region8
    $region5: #{tpu_custom_call.1} parent=1 // loop_body
      %s25 = ssub.s32 %s20, 1
      %s26 = ssub.s32 %s20, 2
      %s27 = sadd.s32 %s20, 1
      %s28 = ssub.s32 %s20, %s27
      %p29 = scmp.eq.s32.totalorder %s28, 0
      %s31 = sadd.s32 %s30, 1
      %s32 = scalar_select %p29, %s30, %s31
      %p35 = pneg %p29
      %p36 = scmp.eq.s32.totalorder %s20, 1
      %p37 = por %p35, %p36
      %p38 = scmp.ne.s32.totalorder %s30, %s33
      %p39 = scmp.eq.s32.totalorder %s20, 0
      %p40 = por %p38, %p39
      %p41 = scmp.ne.s32.totalorder %s30, %s33
      %p42 = scmp.eq.s32.totalorder %s25, 1
      %p43 = por %p41, %p42
      %p44 = scmp.ne.s32.totalorder %s33, %s34
      %p45 = scmp.eq.s32.totalorder %s25, 0
      %p46 = por %p44, %p45
      %p47 = scmp.ne.s32.totalorder %s33, %s34
      %p48 = scmp.eq.s32.totalorder %s26, 1
      %p49 = por %p47, %p48
      %p51 = scmp.ne.s32.totalorder %s34, %s50
      %p52 = scmp.eq.s32.totalorder %s26, 0
      %p53 = por %p51, %p52
      %s55 = sadd.s32 %s54, 1
      %p58 = scmp.eq.s32.totalorder %s20, 1
      %p59 = scmp.ne.s32.totalorder %s54, %s56
      %p60 = scmp.eq.s32.totalorder %s20, 0
      %p61 = por %p59, %p60
      %p62 = scmp.ne.s32.totalorder %s54, %s56
      %p63 = scmp.eq.s32.totalorder %s25, 1
      %p64 = por %p62, %p63
      %p65 = scmp.ne.s32.totalorder %s56, %s57
      %p66 = scmp.eq.s32.totalorder %s25, 0
      %p67 = por %p65, %p66
      %p68 = scmp.ne.s32.totalorder %s56, %s57
      %p69 = scmp.eq.s32.totalorder %s26, 1
      %p70 = por %p68, %p69
      %p72 = scmp.ne.s32.totalorder %s57, %s71
      %p73 = scmp.eq.s32.totalorder %s26, 0
      %p74 = por %p72, %p73
      %s76 = sadd.s32 %s75, 1
      %p79 = scmp.eq.s32.totalorder %s20, 1
      %p80 = scmp.ne.s32.totalorder %s75, %s77
      %p81 = scmp.eq.s32.totalorder %s20, 0
      %p82 = por %p80, %p81
      %p83 = scmp.ne.s32.totalorder %s75, %s77
      %p84 = scmp.eq.s32.totalorder %s25, 1
      %p85 = por %p83, %p84
      %p86 = scmp.ne.s32.totalorder %s77, %s78
      %p87 = scmp.eq.s32.totalorder %s25, 0
      %p88 = por %p86, %p87
      %p89 = scmp.ne.s32.totalorder %s77, %s78
      %p90 = scmp.eq.s32.totalorder %s26, 1
      %p91 = por %p89, %p90
      %p93 = scmp.ne.s32.totalorder %s78, %s92
      %p94 = scmp.eq.s32.totalorder %s26, 0
      %p95 = por %p93, %p94
      %s97 = sadd.s32 %s96, 1
      %p100 = scmp.eq.s32.totalorder %s20, 1
      %p101 = scmp.ne.s32.totalorder %s96, %s98
      %p102 = scmp.eq.s32.totalorder %s20, 0
      %p103 = por %p101, %p102
      %p104 = scmp.ne.s32.totalorder %s96, %s98
      %p105 = scmp.eq.s32.totalorder %s25, 1
      %p106 = por %p104, %p105
      %p107 = scmp.ne.s32.totalorder %s98, %s99
      %p108 = scmp.eq.s32.totalorder %s25, 0
      %p109 = por %p107, %p108
      %p110 = scmp.ne.s32.totalorder %s98, %s99
      %p111 = scmp.eq.s32.totalorder %s26, 1
      %p112 = por %p110, %p111
      %p114 = scmp.ne.s32.totalorder %s99, %s113
      %p115 = scmp.eq.s32.totalorder %s26, 0
      %p116 = por %p114, %p115
      %s118 = sadd.s32 %s117, 1
      %p121 = scmp.eq.s32.totalorder %s20, 1
      %p122 = scmp.ne.s32.totalorder %s117, %s119
      %p123 = scmp.eq.s32.totalorder %s20, 0
      %p124 = por %p122, %p123
      %p125 = scmp.ne.s32.totalorder %s117, %s119
      %p126 = scmp.eq.s32.totalorder %s25, 1
      %p127 = por %p125, %p126
      %p128 = scmp.ne.s32.totalorder %s119, %s120
      %p129 = scmp.eq.s32.totalorder %s25, 0
      %p130 = por %p128, %p129
      %p131 = scmp.ne.s32.totalorder %s119, %s120
      %p132 = scmp.eq.s32.totalorder %s26, 1
      %p133 = por %p131, %p132
      %p135 = scmp.ne.s32.totalorder %s120, %s134
      %p136 = scmp.eq.s32.totalorder %s26, 0
      %p137 = por %p135, %p136
      %s139 = sadd.s32 %s138, 1
      %p142 = scmp.eq.s32.totalorder %s20, 1
      %p143 = scmp.ne.s32.totalorder %s138, %s140
      %p144 = scmp.eq.s32.totalorder %s20, 0
      %p145 = por %p143, %p144
      %p146 = scmp.ne.s32.totalorder %s138, %s140
      %p147 = scmp.eq.s32.totalorder %s25, 1
      %p148 = por %p146, %p147
      %p149 = scmp.ne.s32.totalorder %s140, %s141
      %p150 = scmp.eq.s32.totalorder %s25, 0
      %p151 = por %p149, %p150
      %p152 = scmp.ne.s32.totalorder %s140, %s141
      %p153 = scmp.eq.s32.totalorder %s26, 1
      %p154 = por %p152, %p153
      %p156 = scmp.ne.s32.totalorder %s141, %s155
      %p157 = scmp.eq.s32.totalorder %s26, 0
      %p158 = por %p156, %p157
      %s159 = ssub.s32 %s20, %s27
      %p160 = scmp.eq.s32.totalorder %s159, 0
      %s162 = sadd.s32 %s161, 1
      %s163 = scalar_select %p160, %s161, %s162
      %p166 = pneg %p160
      %p167 = scmp.eq.s32.totalorder %s20, 1
      %p168 = por %p166, %p167
      %p169 = scmp.ne.s32.totalorder %s161, %s164
      %p170 = scmp.eq.s32.totalorder %s20, 0
      %p171 = por %p169, %p170
      %p172 = scmp.ne.s32.totalorder %s161, %s164
      %p173 = scmp.eq.s32.totalorder %s25, 1
      %p174 = por %p172, %p173
      %p175 = scmp.ne.s32.totalorder %s164, %s165
      %p176 = scmp.eq.s32.totalorder %s25, 0
      %p177 = por %p175, %p176
      %p178 = scmp.ne.s32.totalorder %s164, %s165
      %p179 = scmp.eq.s32.totalorder %s26, 1
      %p180 = por %p178, %p179
      %p182 = scmp.ne.s32.totalorder %s165, %s181
      %p183 = scmp.eq.s32.totalorder %s26, 0
      %p184 = por %p182, %p183
      %p185 = scmp.le.s32.totalorder 1, %s20
      %p186 = scmp.lt.s32.totalorder %s20, 3
      %p187 = pnand %p185, %p186
      %p188 = pneg %p187
      // Predicated region
      $region9: #{tpu_custom_call.1} parent=5 // pred_check
        _
      $region10: #{tpu_custom_call.1} parent=5 // pred_check_branch
        %190 = sbr.rel (%p187) target = $region12
      $region11: #{tpu_custom_call.1} parent=5 // pred_region
        %s191 = ssub.s32 %s20, 1
        // Predicated region
        $region13: #{tpu_custom_call.1} parent=11 // pred_check
          %p192 = pneg %p67
        $region14: #{tpu_custom_call.1} parent=11 // pred_check_branch
          %194 = sbr.rel (%p192) target = $region16
        $region15: #{tpu_custom_call.1} parent=11 // pred_region
          %196 = vsyncadd [#allocation6], 0
          %s198 = sshll.u32 %s1, 4
          %s199 = int_to_ptr.hbm [resolvable:$true] %s198
          %s200 = sshll.u32 [#allocation5], 4
          %s201 = int_to_ptr.vmem [resolvable:$true] %s200
          %203 = dma.hbm_to_vmem [thread:$0]  %s199, 128, %s201, [#allocation6]
        $region16: #{tpu_custom_call.1} parent=11 // pred_fallthru
          _
        // Predicated region
        $region17: #{tpu_custom_call.1} parent=11 // pred_check
          %p204 = pneg %p88
        $region18: #{tpu_custom_call.1} parent=11 // pred_check_branch
          %206 = sbr.rel (%p204) target = $region20
        $region19: #{tpu_custom_call.1} parent=11 // pred_region
          %208 = vsyncadd [#allocation6], 0
          %s209 = sshll.u32 %s2, 4
          %s210 = int_to_ptr.hbm [resolvable:$true] %s209
          %s211 = sshll.u32 [#allocation7], 4
          %s212 = int_to_ptr.vmem [resolvable:$true] %s211
          %217 = dma.hbm_to_vmem [thread:$0]  %s210, 256, %s212, [#allocation6], 64, 64, 4
        $region20: #{tpu_custom_call.1} parent=11 // pred_fallthru
          _
        // Predicated region
        $region21: #{tpu_custom_call.1} parent=11 // pred_check
          %p218 = pneg %p109
        $region22: #{tpu_custom_call.1} parent=11 // pred_check_branch
          %220 = sbr.rel (%p218) target = $region24
        $region23: #{tpu_custom_call.1} parent=11 // pred_region
          _
        $region24: #{tpu_custom_call.1} parent=11 // pred_fallthru
          _
        // Predicated region
        $region25: #{tpu_custom_call.1} parent=11 // pred_check
          %p221 = pneg %p130
        $region26: #{tpu_custom_call.1} parent=11 // pred_check_branch
          %223 = sbr.rel (%p221) target = $region28
        $region27: #{tpu_custom_call.1} parent=11 // pred_region
          %225 = vsyncadd [#allocation9], 0
          %s226 = sshll.u32 %s4, 4
          %s227 = int_to_ptr.hbm [resolvable:$true] %s226
          %s228 = sshll.u32 [#allocation8], 4
          %s229 = int_to_ptr.vmem [resolvable:$true] %s228
          %234 = dma.hbm_to_vmem [thread:$0]  %s227, 256, %s229, [#allocation9], 64, 64, 4
        $region28: #{tpu_custom_call.1} parent=11 // pred_fallthru
          _
        // Predicated region
        $region29: #{tpu_custom_call.1} parent=11 // pred_check
          %p235 = pneg %p151
        $region30: #{tpu_custom_call.1} parent=11 // pred_check_branch
          %237 = sbr.rel (%p235) target = $region32
        $region31: #{tpu_custom_call.1} parent=11 // pred_region
          _
        $region32: #{tpu_custom_call.1} parent=11 // pred_fallthru
          _
      $region12: #{tpu_custom_call.1} parent=5 // pred_fallthru
        _
      %p238 = scmp.lt.s32.totalorder %s20, 2
      // Predicated region
      $region33: #{tpu_custom_call.1} parent=5 // pred_check
        %p239 = pneg %p238
      $region34: #{tpu_custom_call.1} parent=5 // pred_check_branch
        %241 = sbr.rel (%p239) target = $region36
      $region35: #{tpu_custom_call.1} parent=5 // pred_region
        // Predicated region
        $region37: #{tpu_custom_call.1} parent=35 // pred_check
          %p242 = pneg %p40
        $region38: #{tpu_custom_call.1} parent=35 // pred_check_branch
          %244 = sbr.rel (%p242) target = $region40
        $region39: #{tpu_custom_call.1} parent=35 // pred_region
          %s245 = sand.u32 %s30, 1
          %s246 = scalar_lea.sflag [#allocation3], %s245
          %s247 = sand.u32 %s30, 1
          %s248 = smul.addr %s247, 8
          %s249 = scalar_lea.vmem [#allocation2], %s248
          %251 = vsyncadd %s246, 0
          %s252 = smul.addr %s20, 8
          %s253 = scalar_lea.hbm %s0, %s252
          %s255 = sshll.u32 %s253, 4
          %s256 = int_to_ptr.hbm [resolvable:$true] %s255
          %s257 = sshll.u32 %s249, 4
          %s258 = int_to_ptr.vmem [resolvable:$true] %s257
          %260 = dma.hbm_to_vmem [thread:$0]  %s256, 128, %s258, %s246
        $region40: #{tpu_custom_call.1} parent=35 // pred_fallthru
          _
      $region36: #{tpu_custom_call.1} parent=5 // pred_fallthru
        _
      %p261 = scmp.le.s32.totalorder 1, %s20
      %p262 = scmp.lt.s32.totalorder %s20, 3
      %p263 = pnand %p261, %p262
      %p264 = pneg %p263
      // Predicated region
      $region41: #{tpu_custom_call.1} parent=5 // pred_check
        _
      $region42: #{tpu_custom_call.1} parent=5 // pred_check_branch
        %266 = sbr.rel (%p263) target = $region44
      $region43: #{tpu_custom_call.1} parent=5 // pred_region
        %s267 = ssub.s32 %s20, 1
        %s268 = sand.u32 %s33, 1
        %s269 = scalar_lea.sflag [#allocation3], %s268
        %s270 = sand.u32 %s33, 1
        %s271 = smul.addr %s270, 8
        %s272 = scalar_lea.vmem [#allocation2], %s271
        // Predicated region
        $region45: #{tpu_custom_call.1} parent=43 // pred_check
          %p273 = pneg %p46
        $region46: #{tpu_custom_call.1} parent=43 // pred_check_branch
          %275 = sbr.rel (%p273) target = $region48
        $region47: #{tpu_custom_call.1} parent=43 // pred_region
          %277 = dma.done %s269, 128
        $region48: #{tpu_custom_call.1} parent=43 // pred_fallthru
          _
        // Predicated region
        $region49: #{tpu_custom_call.1} parent=43 // pred_check
          %p278 = pneg %p67
        $region50: #{tpu_custom_call.1} parent=43 // pred_check_branch
          %280 = sbr.rel (%p278) target = $region52
        $region51: #{tpu_custom_call.1} parent=43 // pred_region
          %282 = dma.done [#allocation6], 128
        $region52: #{tpu_custom_call.1} parent=43 // pred_fallthru
          _
        // Predicated region
        $region53: #{tpu_custom_call.1} parent=43 // pred_check
          %p283 = pneg %p88
        $region54: #{tpu_custom_call.1} parent=43 // pred_check_branch
          %285 = sbr.rel (%p283) target = $region56
        $region55: #{tpu_custom_call.1} parent=43 // pred_region
          %287 = dma.done [#allocation6], 256
        $region56: #{tpu_custom_call.1} parent=43 // pred_fallthru
          _
        // Predicated region
        $region57: #{tpu_custom_call.1} parent=43 // pred_check
          %p288 = pneg %p130
        $region58: #{tpu_custom_call.1} parent=43 // pred_check_branch
          %290 = sbr.rel (%p288) target = $region60
        $region59: #{tpu_custom_call.1} parent=43 // pred_region
          %292 = dma.done [#allocation9], 256
        $region60: #{tpu_custom_call.1} parent=43 // pred_fallthru
          _
        %s293 = sand.u32 %s33, 1
        %s294 = scalar_lea.sflag [#allocation3], %s293
        %s295 = sand.u32 %s33, 1
        %s296 = smul.addr %s295, 8
        %s297 = scalar_lea.vmem [#allocation2], %s296
        %p298 = pneg %p46
        %p299 = pneg %p43
        %p300 = pneg %p67
        %p301 = pneg %p64
        %p302 = pneg %p88
        %p303 = pneg %p85
        %p304 = pneg %p109
        %p305 = pneg %p106
        %p306 = pneg %p130
        %p307 = pneg %p127
        %p308 = pneg %p151
        %p309 = pneg %p148
        %p310 = pneg %p177
        %p311 = pneg %p174
        %s312 = sand.u32 %s164, 1
        %s313 = scalar_lea.sflag [#allocation4], %s312
        %s314 = sand.u32 %s164, 1
        %s315 = smul.addr %s314, 8
        %s316 = scalar_lea.vmem [#allocation10], %s315
        %v318 = vld [vmem:[%s272] sm:$0xff]
        %v319 = vpack.c.bf16 %v318, %v318
        %v320 = vld [vmem:[#allocation7] sm:$0xf]
        %v321 = vld [vmem:[#allocation7 + $0x4] sm:$0xf]
        %v322 = vld [vmem:[#allocation7 + $0x8] sm:$0xf]
        %v323 = vld [vmem:[#allocation7 + $0xc] sm:$0xf]
        %v324 = vld [vmem:[%s3] sm:$0x1]
        %v326 = vperm.slane %v324, 0
        %v332 = vunpack.c.l.b16 %v320
        %v333 = vunpack.c.l.b16 %v321
        %v334 = vunpack.c.l.b16 %v322
        %v335 = vunpack.c.l.b16 %v323
        %v336 = vpack.c.b16 %v333, %v332
        %v337 = vpack.c.b16 %v335, %v334
        %vm340 = vcmask 261120
        %v342 = vsel %vm340, %v319, 0
        %344 = vmatpush.bf16.msra.mxu0 0
        %345 = vmatpush.bf16.msra.mxu0 0
        %346 = vmatpush.bf16.msra.mxu0 0
        %347 = vmatpush.bf16.msra.mxu0 0
        %348 = vmatpush.bf16.msra.mxu0 0
        %349 = vmatpush.bf16.msra.mxu0 0
        %350 = vmatpush.bf16.msra.mxu0 %v337
        %351 = vmatpush.bf16.msra.mxu0 %v336
        %352 = vmatmul.bf16.gmra.mxu0 %v342
        %v353 = vpop.f32.mrf.mxu0
        %v354 = vadd.f32 %v326, %v353
        %v355 = vpop.f32.mrf.mxu0
        %356 = vdwg.mxu0
        %v357 = vpack.c.bf16 %v354, %v354
        %v358 = vld [vmem:[#allocation5] sm:$0xff]
        %v360 = vunpack.c.l.b16 %v357
        %v361 = vpack.c.b16 %v360, %v360
        %362 = vrot.lane.b32.xlu0 %v361, 96
        %v363 = vpop.permute.xlu0 %362
        %vm364 = vcmask 64512
        %v366 = vsel %vm364, %v357, 0
        %v369 = vsel %vm364, %v363, 0
        %371 = vmatpush.bf16.xpose.msra.mxu0 0
        %372 = vmatpush.bf16.xpose.msra.mxu0 0
        %373 = vmatpush.bf16.xpose.msra.mxu0 0
        %374 = vmatpush.bf16.xpose.msra.mxu0 0
        %375 = vmatpush.bf16.xpose.msra.mxu0 0
        %376 = vmatpush.bf16.xpose.msra.mxu0 0
        %377 = vmatpush.bf16.xpose.msra.mxu0 0
        %378 = vmatpush.bf16.xpose.msra.mxu0 %v369
        %379 = vmatmul.bf16.gmra.mxu0 %v366
        %v380 = vpop.f32.mrf.mxu0
        %v381 = vadd.f32 %v358, %v380
        %v382 = vpop.f32.mrf.mxu0
        %383 = vdwg.mxu0
        %v384 = vsel %vm364, %v381, -inf
        %385 = vmax.xlane.f32.xlu0 %v384
        %v386 = vpop.xlane.xlu0 %385
        %v387 = vsub.f32 %v381, %v386
        %v388 = vmul.f32 %v387, 1.442695
        %v389 = vpow.pop %v388
        %v390 = vsel %vm364, %v389, 0.0
        %391 = vadd.xlane.f32.xlu0 %v390
        %v392 = vpop.xlane.xlu0 %391
        %v393 = vrcp.pop %v392
        %v394 = vmul.f32 %v389, %v393
        %v395 = vpack.c.bf16 %v394, %v394
        %396 = vrot.lane.b32.xlu0 %v361, 64
        %v397 = vpop.permute.xlu0 %396
        %v399 = vsel %vm364, %v395, 0
        %vm401 = vcmask 1043456
        %v403 = vsel %vm401, %v397, 0
        %405 = vmatpush.bf16.msra.mxu0 0
        %406 = vmatpush.bf16.msra.mxu0 0
        %407 = vmatpush.bf16.msra.mxu0 0
        %408 = vmatpush.bf16.msra.mxu0 0
        %409 = vmatpush.bf16.msra.mxu0 0
        %410 = vmatpush.bf16.msra.mxu0 0
        %411 = vmatpush.bf16.msra.mxu0 0
        %412 = vmatpush.bf16.msra.mxu0 %v403
        %413 = vmatmul.bf16.gmra.mxu0 %v399
        %v414 = vpop.f32.mrf.mxu0
        %v415 = vadd.f32 0.0, %v414
        %v416 = vpop.f32.mrf.mxu0
        %417 = vdwg.mxu0
        %418 = vrot.lane.b32.xlu0 %v361, 120
        %v419 = vpop.permute.xlu0 %418
        %420 = vrot.lane.b32.xlu0 %v361, 88
        %v421 = vpop.permute.xlu0 %420
        %v423 = vsel %vm364, %v419, 0
        %v426 = vsel %vm364, %v421, 0
        %428 = vmatpush.bf16.xpose.msra.mxu0 0
        %429 = vmatpush.bf16.xpose.msra.mxu0 0
        %430 = vmatpush.bf16.xpose.msra.mxu0 0
        %431 = vmatpush.bf16.xpose.msra.mxu0 0
        %432 = vmatpush.bf16.xpose.msra.mxu0 0
        %433 = vmatpush.bf16.xpose.msra.mxu0 0
        %434 = vmatpush.bf16.xpose.msra.mxu0 0
        %435 = vmatpush.bf16.xpose.msra.mxu0 %v426
        %436 = vmatmul.bf16.gmra.mxu0 %v423
        %v437 = vpop.f32.mrf.mxu0
        %v438 = vadd.f32 %v358, %v437
        %v439 = vpop.f32.mrf.mxu0
        %440 = vdwg.mxu0
        %v441 = vsel %vm364, %v438, -inf
        %442 = vmax.xlane.f32.xlu0 %v441
        %v443 = vpop.xlane.xlu0 %442
        %v444 = vsub.f32 %v438, %v443
        %v445 = vmul.f32 %v444, 1.442695
        %v446 = vpow.pop %v445
        %v447 = vsel %vm364, %v446, 0.0
        %448 = vadd.xlane.f32.xlu0 %v447
        %v449 = vpop.xlane.xlu0 %448
        %v450 = vrcp.pop %v449
        %v451 = vmul.f32 %v446, %v450
        %v452 = vpack.c.bf16 %v451, %v451
        %453 = vrot.lane.b32.xlu0 %v361, 56
        %v454 = vpop.permute.xlu0 %453
        %v456 = vsel %vm364, %v452, 0
        %v459 = vsel %vm401, %v454, 0
        %461 = vmatpush.bf16.msra.mxu0 0
        %462 = vmatpush.bf16.msra.mxu0 0
        %463 = vmatpush.bf16.msra.mxu0 0
        %464 = vmatpush.bf16.msra.mxu0 0
        %465 = vmatpush.bf16.msra.mxu0 0
        %466 = vmatpush.bf16.msra.mxu0 0
        %467 = vmatpush.bf16.msra.mxu0 0
        %468 = vmatpush.bf16.msra.mxu0 %v459
        %469 = vmatmul.bf16.gmra.mxu0 %v456
        %v470 = vpop.f32.mrf.mxu0
        %v471 = vadd.f32 0.0, %v470
        %v472 = vpop.f32.mrf.mxu0
        %473 = vdwg.mxu0
        %474 = vrot.lane.b32.xlu0 %v361, 112
        %v475 = vpop.permute.xlu0 %474
        %476 = vrot.lane.b32.xlu0 %v361, 80
        %v477 = vpop.permute.xlu0 %476
        %v479 = vsel %vm364, %v475, 0
        %v482 = vsel %vm364, %v477, 0
        %484 = vmatpush.bf16.xpose.msra.mxu0 0
        %485 = vmatpush.bf16.xpose.msra.mxu0 0
        %486 = vmatpush.bf16.xpose.msra.mxu0 0
        %487 = vmatpush.bf16.xpose.msra.mxu0 0
        %488 = vmatpush.bf16.xpose.msra.mxu0 0
        %489 = vmatpush.bf16.xpose.msra.mxu0 0
        %490 = vmatpush.bf16.xpose.msra.mxu0 0
        %491 = vmatpush.bf16.xpose.msra.mxu0 %v482
        %492 = vmatmul.bf16.gmra.mxu0 %v479
        %v493 = vpop.f32.mrf.mxu0
        %v494 = vadd.f32 %v358, %v493
        %v495 = vpop.f32.mrf.mxu0
        %496 = vdwg.mxu0
        %v497 = vsel %vm364, %v494, -inf
        %498 = vmax.xlane.f32.xlu0 %v497
        %v499 = vpop.xlane.xlu0 %498
        %v500 = vsub.f32 %v494, %v499
        %v501 = vmul.f32 %v500, 1.442695
        %v502 = vpow.pop %v501
        %v503 = vsel %vm364, %v502, 0.0
        %504 = vadd.xlane.f32.xlu0 %v503
        %v505 = vpop.xlane.xlu0 %504
        %v506 = vrcp.pop %v505
        %v507 = vmul.f32 %v502, %v506
        %v508 = vpack.c.bf16 %v507, %v507
        %509 = vrot.lane.b32.xlu0 %v361, 48
        %v510 = vpop.permute.xlu0 %509
        %v512 = vsel %vm364, %v508, 0
        %v515 = vsel %vm401, %v510, 0
        %517 = vmatpush.bf16.msra.mxu0 0
        %518 = vmatpush.bf16.msra.mxu0 0
        %519 = vmatpush.bf16.msra.mxu0 0
        %520 = vmatpush.bf16.msra.mxu0 0
        %521 = vmatpush.bf16.msra.mxu0 0
        %522 = vmatpush.bf16.msra.mxu0 0
        %523 = vmatpush.bf16.msra.mxu0 0
        %524 = vmatpush.bf16.msra.mxu0 %v515
        %525 = vmatmul.bf16.gmra.mxu0 %v512
        %v526 = vpop.f32.mrf.mxu0
        %v527 = vadd.f32 0.0, %v526
        %v528 = vpop.f32.mrf.mxu0
        %529 = vdwg.mxu0
        %530 = vrot.lane.b32.xlu0 %v361, 104
        %v531 = vpop.permute.xlu0 %530
        %532 = vrot.lane.b32.xlu0 %v361, 72
        %v533 = vpop.permute.xlu0 %532
        %v535 = vsel %vm364, %v531, 0
        %v538 = vsel %vm364, %v533, 0
        %540 = vmatpush.bf16.xpose.msra.mxu0 0
        %541 = vmatpush.bf16.xpose.msra.mxu0 0
        %542 = vmatpush.bf16.xpose.msra.mxu0 0
        %543 = vmatpush.bf16.xpose.msra.mxu0 0
        %544 = vmatpush.bf16.xpose.msra.mxu0 0
        %545 = vmatpush.bf16.xpose.msra.mxu0 0
        %546 = vmatpush.bf16.xpose.msra.mxu0 0
        %547 = vmatpush.bf16.xpose.msra.mxu0 %v538
        %548 = vmatmul.bf16.gmra.mxu0 %v535
        %v549 = vpop.f32.mrf.mxu0
        %v550 = vadd.f32 %v358, %v549
        %v551 = vpop.f32.mrf.mxu0
        %552 = vdwg.mxu0
        %v553 = vsel %vm364, %v550, -inf
        %554 = vmax.xlane.f32.xlu0 %v553
        %v555 = vpop.xlane.xlu0 %554
        %v556 = vsub.f32 %v550, %v555
        %v557 = vmul.f32 %v556, 1.442695
        %v558 = vpow.pop %v557
        %v559 = vsel %vm364, %v558, 0.0
        %560 = vadd.xlane.f32.xlu0 %v559
        %v561 = vpop.xlane.xlu0 %560
        %v562 = vrcp.pop %v561
        %v563 = vmul.f32 %v558, %v562
        %v564 = vpack.c.bf16 %v563, %v563
        %565 = vrot.lane.b32.xlu0 %v361, 40
        %v566 = vpop.permute.xlu0 %565
        %v568 = vsel %vm364, %v564, 0
        %v571 = vsel %vm401, %v566, 0
        %573 = vmatpush.bf16.msra.mxu0 0
        %574 = vmatpush.bf16.msra.mxu0 0
        %575 = vmatpush.bf16.msra.mxu0 0
        %576 = vmatpush.bf16.msra.mxu0 0
        %577 = vmatpush.bf16.msra.mxu0 0
        %578 = vmatpush.bf16.msra.mxu0 0
        %579 = vmatpush.bf16.msra.mxu0 0
        %580 = vmatpush.bf16.msra.mxu0 %v571
        %581 = vmatmul.bf16.gmra.mxu0 %v568
        %v582 = vpop.f32.mrf.mxu0
        %v583 = vadd.f32 0.0, %v582
        %v584 = vpop.f32.mrf.mxu0
        %585 = vdwg.mxu0
        %587 = vrot.lane.b32.xlu0 %v471, 8
        %v588 = vpop.permute.xlu0 %587
        %591 = vrot.lane.b32.xlu0 %v527, 16
        %v592 = vpop.permute.xlu0 %591
        %595 = vrot.lane.b32.xlu0 %v583, 24
        %v596 = vpop.permute.xlu0 %595
        %v598 = vsel %vm364, %v415, %v588
        %vm599 = vcmask 130048
        %v600 = vsel %vm599, %v598, %v592
        %vm601 = vcmask 195584
        %v602 = vsel %vm601, %v600, %v596
        %v603 = vadd.f32 %v602, %v318
        %v604 = vpack.c.bf16 %v603, %v603
        %v605 = vld [vmem:[#allocation8] sm:$0xf]
        %v606 = vld [vmem:[#allocation8 + $0x4] sm:$0xf]
        %v607 = vld [vmem:[#allocation8 + $0x8] sm:$0xf]
        %v608 = vld [vmem:[#allocation8 + $0xc] sm:$0xf]
        %v609 = vld [vmem:[%s5] sm:$0x1]
        %v611 = vperm.slane %v609, 0
        %v617 = vunpack.c.l.b16 %v605
        %v618 = vunpack.c.l.b16 %v606
        %v619 = vunpack.c.l.b16 %v607
        %v620 = vunpack.c.l.b16 %v608
        %v621 = vpack.c.b16 %v618, %v617
        %v622 = vpack.c.b16 %v620, %v619
        %v626 = vsel %vm340, %v604, 0
        %628 = vmatpush.bf16.msra.mxu0 0
        %629 = vmatpush.bf16.msra.mxu0 0
        %630 = vmatpush.bf16.msra.mxu0 0
        %631 = vmatpush.bf16.msra.mxu0 0
        %632 = vmatpush.bf16.msra.mxu0 0
        %633 = vmatpush.bf16.msra.mxu0 0
        %634 = vmatpush.bf16.msra.mxu0 %v622
        %635 = vmatpush.bf16.msra.mxu0 %v621
        %636 = vmatmul.bf16.gmra.mxu0 %v626
        %v637 = vpop.f32.mrf.mxu0
        %v638 = vadd.f32 %v611, %v637
        %v639 = vpop.f32.mrf.mxu0
        %640 = vdwg.mxu0
        %v641 = vmax.f32 %v638, 0.0
        %v642 = vadd.f32 %v641, %v603
        %643 = vst.msk [vmem:[%s316] sm:$0xff] %vm340, %v642
        %s644 = sand.u32 %s164, 1
        %s645 = scalar_lea.sflag [#allocation4], %s644
        %s646 = sand.u32 %s164, 1
        %s647 = smul.addr %s646, 8
        %s648 = scalar_lea.vmem [#allocation10], %s647
        // Predicated region
        $region61: #{tpu_custom_call.1} parent=43 // pred_check
          %p649 = pneg %p174
        $region62: #{tpu_custom_call.1} parent=43 // pred_check_branch
          %651 = sbr.rel (%p649) target = $region64
        $region63: #{tpu_custom_call.1} parent=43 // pred_region
          %653 = vsyncadd %s645, 0
          %s654 = smul.addr %s25, 8
          %s655 = scalar_lea.hbm %s6, %s654
          %s657 = sshll.u32 %s648, 4
          %s658 = int_to_ptr.vmem [resolvable:$true] %s657
          %s659 = sshll.u32 %s655, 4
          %s660 = int_to_ptr.hbm [resolvable:$true] %s659
          %662 = dma.vmem_to_hbm [thread:$0]  %s658, 128, %s660, %s645
        $region64: #{tpu_custom_call.1} parent=43 // pred_fallthru
          _
      $region44: #{tpu_custom_call.1} parent=5 // pred_fallthru
        _
      %p663 = scmp.le.s32.totalorder 2, %s20
      // Predicated region
      $region65: #{tpu_custom_call.1} parent=5 // pred_check
        %p664 = pneg %p663
      $region66: #{tpu_custom_call.1} parent=5 // pred_check_branch
        %666 = sbr.rel (%p664) target = $region68
      $region67: #{tpu_custom_call.1} parent=5 // pred_region
        %s667 = ssub.s32 %s20, 2
        // Predicated region
        $region69: #{tpu_custom_call.1} parent=67 // pred_check
          %p668 = pneg %p180
        $region70: #{tpu_custom_call.1} parent=67 // pred_check_branch
          %670 = sbr.rel (%p668) target = $region72
        $region71: #{tpu_custom_call.1} parent=67 // pred_region
          %s671 = sand.u32 %s165, 1
          %s672 = scalar_lea.sflag [#allocation4], %s671
          %s673 = sand.u32 %s165, 1
          %s674 = smul.addr %s673, 8
          %s675 = scalar_lea.vmem [#allocation10], %s674
          %677 = dma.done %s672, 128
        $region72: #{tpu_custom_call.1} parent=67 // pred_fallthru
          _
      $region68: #{tpu_custom_call.1} parent=5 // pred_fallthru
        _
    $region6: #{tpu_custom_call.1} parent=1 // loop_footer
      %s24 = sadd.s32 1, %s20
    $region7: #{tpu_custom_call.1} parent=1 // loop_footer_branch
      %19 = sbr.rel target = $region3
    $region8: #{tpu_custom_call.1} parent=1 // loop_exit
      _
    %678 = vsyncpa [#allocation3], 1
    %s679 = scalar_lea.sflag [#allocation3], 1
    %680 = vsyncpa %s679, 1
    %681 = vsyncpa [#allocation6], 1
    %682 = vsyncpa [#allocation9], 1
    %683 = vsyncpa [#allocation4], 1
    %s684 = scalar_lea.sflag [#allocation4], 1
    %685 = vsyncpa %s684, 1

</llo_original>
